<compile_context>
chip_gen: v7x
topology: tpu7x:2x2x1
jax: 0.10.0
libtpu: 0.0.40
codegen_flags: <defaults>
</compile_context>

<pallas_src>
import functools

import jax
import jax.numpy as jnp
from jax.experimental import pallas as pl
from jax.experimental.pallas import tpu as pltpu


def _round_up(a, b):
    return ((a + b - 1) // b) * b


def _lp_kernel_single(x_ref, w_ref, b_ref, o_ref, *, compute_dtype):
    # x_ref: (1, TM, K)  w_ref: (1, K, TN)  b_ref: (1, 1, TN)  o_ref: (1, TM, TN)
    x = x_ref[0].astype(compute_dtype)
    w = w_ref[0].astype(compute_dtype)
    acc = jnp.dot(x, w, preferred_element_type=jnp.float32)
    o_ref[0] = (acc + b_ref[0]).astype(o_ref.dtype)


def _lp_kernel_ksplit(x_ref, w_ref, b_ref, o_ref, acc_ref, *, compute_dtype):
    # x_ref: (1, TM, TK)  w_ref: (1, TK, TN)  b_ref: (1, 1, TN)
    # o_ref: (1, TM, TN)  acc_ref: (TM, TN) float32
    k = pl.program_id(3)

    @pl.when(k == 0)
    def _():
        acc_ref[...] = jnp.zeros_like(acc_ref)

    x = x_ref[0].astype(compute_dtype)
    w = w_ref[0].astype(compute_dtype)
    acc_ref[...] += jnp.dot(x, w, preferred_element_type=jnp.float32)

    @pl.when(k == pl.num_programs(3) - 1)
    def _():
        # bias added exactly once, on the final K step
        o_ref[0] = (acc_ref[...] + b_ref[0]).astype(o_ref.dtype)


_MIN_PALLAS_FLOPS = 1 << 22   # below this, XLA's fused einsum beats per-step overhead
_MAX_SINGLE_TK = 2048         # largest K handled without a reduction-axis split


def linear_parallel(x, weight, bias, *, compute_dtype=jnp.bfloat16,
                    force="auto", out_layout="npo"):
    """
    Args:
        x:      (N, P, I)
        weight: (P, I, O)
        bias:   (P, O)
        compute_dtype: dtype of MXU operands (accumulation is always float32);
            bfloat16 is the fast path on v5e/v6e/v7x.
        force:  "auto" (einsum fallback for tiny problems), "pallas", or "xla".
        out_layout: "npo" (PyTorch convention, default) or "pno" (skips the
            final transpose -- one fewer HBM pass if downstream can consume it).
    Returns:
        (N, P, O)  (or (P, N, O) if out_layout == "pno")
    """
    N, P, I = x.shape
    _, _, O = weight.shape

    flops = 2 * N * P * I * O
    if force == "xla" or (force == "auto" and flops < _MIN_PALLAS_FLOPS):
        out = jnp.einsum("npi,pio->npo", x, weight) + bias[None, :, :]
        return out if out_layout == "npo" else jnp.transpose(out, (1, 0, 2))

    # ---- tile selection (MXU-friendly, VMEM-safe on 64 MiB v7x) ------------
    tm = 256 if N >= 256 else _round_up(N, 8)
    tn = 256 if O >= 256 else _round_up(O, 128)
    if I <= _MAX_SINGLE_TK:
        tk, n_k = I, 1               # no K split: no accumulator carried across steps
    else:
        n_k = -(-I // _MAX_SINGLE_TK)
        tk = _round_up(-(-I // n_k), 128)
    n_pad = _round_up(N, tm)
    o_pad = _round_up(O, tn)
    i_pad = tk * n_k
    n_m, n_n = n_pad // tm, o_pad // tn

    # ---- layout / padding (zero padding is matmul-neutral) -----------------
    x_t = jnp.transpose(x, (1, 0, 2))                                   # (P, N, I)
    x_t = jnp.pad(x_t, ((0, 0), (0, n_pad - N), (0, i_pad - I)))
    w_p = jnp.pad(weight, ((0, 0), (0, i_pad - I), (0, o_pad - O)))
    b_p = jnp.pad(bias, ((0, 0), (0, o_pad - O))).reshape(P, 1, o_pad)  # (P, 1, O_pad)

    # double-buffered tiles + f32 accumulator + headroom, capped for v7x
    bpe = jnp.dtype(x.dtype).itemsize
    tile_bytes = 2 * bpe * (tm * tk + tk * tn + tn + tm * tn) + 4 * tm * tn
    vmem_limit = int(min(max(tile_bytes + (8 << 20), 32 << 20), 48 << 20))

    bytes_accessed = bpe * (P * n_pad * i_pad + P * i_pad * o_pad
                            + P * o_pad + P * n_pad * o_pad)
    cost = pl.CostEstimate(flops=2 * P * n_pad * i_pad * o_pad,
                           transcendentals=0, bytes_accessed=bytes_accessed)

    out_shape = jax.ShapeDtypeStruct((P, n_pad, o_pad), x.dtype)

    if n_k == 1:
        kernel = functools.partial(_lp_kernel_single, compute_dtype=compute_dtype)
        grid_spec = pltpu.PrefetchScalarGridSpec(
            num_scalar_prefetch=0,
            grid=(P, n_m, n_n),
            in_specs=[
                pl.BlockSpec((1, tm, tk), lambda p, i, j: (p, i, 0)),
                pl.BlockSpec((1, tk, tn), lambda p, i, j: (p, 0, j)),
                pl.BlockSpec((1, 1, tn), lambda p, i, j: (p, 0, j)),
            ],
            out_specs=pl.BlockSpec((1, tm, tn), lambda p, i, j: (p, i, j)),
        )
        semantics = ("parallel", "parallel", "parallel")
    else:
        kernel = functools.partial(_lp_kernel_ksplit, compute_dtype=compute_dtype)
        grid_spec = pltpu.PrefetchScalarGridSpec(
            num_scalar_prefetch=0,
            grid=(P, n_m, n_n, n_k),
            in_specs=[
                pl.BlockSpec((1, tm, tk), lambda p, i, j, k: (p, i, k)),
                pl.BlockSpec((1, tk, tn), lambda p, i, j, k: (p, k, j)),
                pl.BlockSpec((1, 1, tn), lambda p, i, j, k: (p, 0, j)),
            ],
            out_specs=pl.BlockSpec((1, tm, tn), lambda p, i, j, k: (p, i, j)),
            scratch_shapes=[pltpu.VMEM((tm, tn), jnp.float32)],
        )
        semantics = ("parallel", "parallel", "parallel", "arbitrary")

    out_t = pl.pallas_call(
        kernel,
        out_shape=out_shape,
        grid_spec=grid_spec,
        compiler_params=pltpu.CompilerParams(
            dimension_semantics=semantics,
            vmem_limit_bytes=vmem_limit,
        ),
        cost_estimate=cost,
    )(x_t, w_p, b_p)

    out_t = out_t[:, :N, :O]                                            # (P, N, O)
    if out_layout == "pno":
        return out_t
    return jnp.transpose(out_t, (1, 0, 2))                              # (N, P, O)


def init_params(key, in_dim, out_dim, parallel_dim):
    """Deterministic init matching nn.init.uniform_(-bound, bound)."""
    bound = 1.0 / in_dim ** 0.5
    kw, kb = jax.random.split(key)
    weight = jax.random.uniform(
        kw, (parallel_dim, in_dim, out_dim), jnp.float32, -bound, bound)
    bias = jax.random.uniform(
        kb, (parallel_dim, out_dim), jnp.float32, -bound, bound)
    return weight, bias


if __name__ == "__main__":
    # Small shapes consistent with the module's forward signature:
    # x: (batch_size, parallel_dim, in_dim)
    batch_size, parallel_dim, in_dim, out_dim = 8, 4, 16, 32

    key = jax.random.PRNGKey(0)
    kx, kp = jax.random.split(key)
    x = jax.random.normal(kx, (batch_size, parallel_dim, in_dim), jnp.float32)
    weight, bias = init_params(kp, in_dim, out_dim, parallel_dim)

    ref = jnp.einsum("npi,pio->npo", x, weight) + bias[None, :, :]

    # 1) Pallas kernel, f32 MXU operands: tight agreement with the reference.
    out_f32 = jax.block_until_ready(
        linear_parallel(x, weight, bias, compute_dtype=jnp.float32, force="pallas"))
    assert out_f32.shape == (batch_size, parallel_dim, out_dim)
    assert jnp.allclose(out_f32, ref, atol=1e-5, rtol=1e-5)

    # 2) Pallas kernel, bf16 MXU operands / f32 accumulation (the fast default).
    out_bf16 = jax.block_until_ready(
        linear_parallel(x, weight, bias, force="pallas"))
    assert jnp.allclose(out_bf16, ref, atol=2e-2, rtol=2e-2)

    # 3) Auto path: this problem is tiny, so it takes the XLA einsum fallback.
    out_auto = jax.block_until_ready(linear_parallel(x, weight, bias))
    assert out_auto.shape == (batch_size, parallel_dim, out_dim)
    assert jnp.allclose(out_auto, ref, atol=1e-5, rtol=1e-5)

    # 4) A multi-tile shape exercising N/O tiling, padding, and the parallel grid.
    n2, p2, i2, o2 = 272, 3, 200, 160
    kx2, kp2 = jax.random.split(jax.random.fold_in(key, 1))
    x2 = jax.random.normal(kx2, (n2, p2, i2), jnp.float32)
    w2, b2 = init_params(kp2, i2, o2, p2)
    ref2 = jnp.einsum("npi,pio->npo", x2, w2) + b2[None, :, :]
    out2 = jax.block_until_ready(linear_parallel(x2, w2, b2, force="pallas"))
    assert out2.shape == (n2, p2, o2)
    assert jnp.allclose(out2, ref2, atol=5e-2, rtol=5e-2)

    # 5) K-split path (I > 2048) exercising the accumulator kernel.
    n3, p3, i3, o3 = 128, 2, 2304, 128
    kx3, kp3 = jax.random.split(jax.random.fold_in(key, 2))
    x3 = jax.random.normal(kx3, (n3, p3, i3), jnp.float32)
    w3, b3 = init_params(kp3, i3, o3, p3)
    ref3 = jnp.einsum("npi,pio->npo", x3, w3) + b3[None, :, :]
    out3 = jax.block_until_ready(linear_parallel(x3, w3, b3, force="pallas"))
    assert out3.shape == (n3, p3, o3)
    assert jnp.allclose(out3, ref3, atol=5e-2, rtol=5e-2)

    # 6) "pno" layout path (skips the trailing transpose).
    out_pno = jax.block_until_ready(
        linear_parallel(x2, w2, b2, force="pallas", out_layout="pno"))
    assert out_pno.shape == (p2, n2, o2)
    assert jnp.allclose(jnp.transpose(out_pno, (1, 0, 2)), ref2, atol=5e-2, rtol=5e-2)

    print("KERNEL_OK")
</pallas_src>

<mosaic_0001>
module attributes {stable_mosaic.version = 11 : i64} {
  func.func @_lp_kernel_single(%arg0: i32, %arg1: i32, %arg2: i32, %arg3: memref<1x8x16xf32, #tpu.memory_space<vmem>>, %arg4: memref<1x16x128xf32, #tpu.memory_space<vmem>>, %arg5: memref<1x1x128xf32, #tpu.memory_space<vmem>>, %arg6: memref<1x8x128xf32, #tpu.memory_space<vmem>>) attributes {dimension_semantics = [#tpu.dimension_semantics<parallel>, #tpu.dimension_semantics<parallel>, #tpu.dimension_semantics<parallel>], iteration_bounds = array<i64: 4, 1, 1>, scalar_prefetch = 0 : i64, scratch_operands = 0 : i64, tpu.core_type = #tpu.core_type<tc>, window_params = [{transform_indices = @transform_0, window_bounds = array<i64: 1, 8, 16>}, {transform_indices = @transform_1, window_bounds = array<i64: 1, 16, 128>}, {transform_indices = @transform_2, window_bounds = array<i64: 1, 1, 128>}, {transform_indices = @transform_3, window_bounds = array<i64: 1, 8, 128>}]} {
    %c0 = arith.constant 0 : index
    %c0_0 = arith.constant 0 : index
    %c0_1 = arith.constant 0 : index
    %0 = vector.load %arg3[%c0, %c0_0, %c0_1] : memref<1x8x16xf32, #tpu.memory_space<vmem>>, vector<1x8x16xf32>
    %1 = vector.shape_cast %0 : vector<1x8x16xf32> to vector<8x16xf32>
    %c0_2 = arith.constant 0 : index
    %c0_3 = arith.constant 0 : index
    %c0_4 = arith.constant 0 : index
    %2 = vector.load %arg4[%c0_2, %c0_3, %c0_4] : memref<1x16x128xf32, #tpu.memory_space<vmem>>, vector<1x16x128xf32>
    %3 = vector.shape_cast %2 : vector<1x16x128xf32> to vector<16x128xf32>
    %cst = arith.constant dense<0.000000e+00> : vector<8x128xf32>
    %4 = tpu.matmul %1, %3, %cst {dimension_numbers = #tpu.dot_dimension_numbers<[1], [0], [0], [1], [0, 0, 1, 1], [], []>} : vector<8x16xf32>, vector<16x128xf32>, vector<8x128xf32> -> vector<8x128xf32>
    %c0_5 = arith.constant 0 : index
    %c0_6 = arith.constant 0 : index
    %c0_7 = arith.constant 0 : index
    %5 = vector.load %arg5[%c0_5, %c0_6, %c0_7] : memref<1x1x128xf32, #tpu.memory_space<vmem>>, vector<1x1x128xf32>
    %6 = vector.shape_cast %5 : vector<1x1x128xf32> to vector<1x128xf32>
    %7 = vector.broadcast %6 : vector<1x128xf32> to vector<8x128xf32>
    %8 = arith.addf %4, %7 : vector<8x128xf32>
    %c0_8 = arith.constant 0 : index
    %c0_9 = arith.constant 0 : index
    %c0_10 = arith.constant 0 : index
    %9 = vector.load %arg6[%c0_8, %c0_9, %c0_10] : memref<1x8x128xf32, #tpu.memory_space<vmem>>, vector<1x8x128xf32>
    %10 = vector.shape_cast %9 : vector<1x8x128xf32> to vector<8x128xf32>
    %11 = vector.shape_cast %8 : vector<8x128xf32> to vector<1x8x128xf32>
    tpu.vector_store %arg6[%c0_8, %c0_9, %c0_10], %11 {strides = array<i32>} : memref<1x8x128xf32, #tpu.memory_space<vmem>>, vector<1x8x128xf32>,
    return
  }
  func.func @transform_0(%arg0: i32, %arg1: i32, %arg2: i32) -> (i32, i32, i32) {
    %c0_i32 = arith.constant 0 : i32
    %c0_i32_0 = arith.constant 0 : i32
    return %arg0, %arg1, %c0_i32 : i32, i32, i32
  }
  func.func @transform_1(%arg0: i32, %arg1: i32, %arg2: i32) -> (i32, i32, i32) {
    %c0_i32 = arith.constant 0 : i32
    %c0_i32_0 = arith.constant 0 : i32
    return %arg0, %c0_i32, %arg2 : i32, i32, i32
  }
  func.func @transform_2(%arg0: i32, %arg1: i32, %arg2: i32) -> (i32, i32, i32) {
    %c0_i32 = arith.constant 0 : i32
    %c0_i32_0 = arith.constant 0 : i32
    return %arg0, %c0_i32, %arg2 : i32, i32, i32
  }
  func.func @transform_3(%arg0: i32, %arg1: i32, %arg2: i32) -> (i32, i32, i32) {
    %c0_i32 = arith.constant 0 : i32
    return %arg0, %arg1, %arg2 : i32, i32, i32
  }
}

</mosaic_0001>

<llo_original>
// kernel: tpu_custom_call.1
$region0: #{tpu_custom_call.1}
  #allocation0 [shape = 'u32[]', space=smem, size = 0x4, offset = 0x4, fixed_abs, tag = 'smem constant byte address 0x4 - core index']
  #allocation1 [shape = 'u32[144,128]{1,0:T(1,128)}', space=vmem, size = 0x12000, scoped, tag = 'internal scratch']
  %s0 = inlined_call_operand.hbm [shape: f32[4,8,16], index: 0, kind: input, shape index: {}]
  %s1 = inlined_call_operand.hbm [shape: f32[4,16,128], index: 1, kind: input, shape index: {}]
  %s2 = inlined_call_operand.vmem [shape: f32[4,1,128], index: 2, kind: input, shape index: {}]
  %s3 = inlined_call_operand.hbm [shape: f32[4,8,128], index: 3, kind: output, shape index: {}]
  %s4 = sld [smem:[#allocation0]]
  $region53: #{tpu_custom_call.1} parent=0
    _
  %s6 = ssub.s32 1, %s4
  %s7 = scalar_select 0, %s6, %s4
  $region1: #{tpu_custom_call.1} parent=0
    #allocation2 [shape = 'u8[8192]{0}', space=vmem, size = 0x2000, scoped, tag = 'input window, operand 0']
    #allocation3 [shape = 's32[2]{0}', space=sflag, size = 0x8, scoped, tag = 'scoped memory for tpu_custom_call.1']
    #allocation4 [shape = 's32[2]{0}', space=sflag, size = 0x8, scoped, tag = 'scoped memory for tpu_custom_call.1']
    #allocation5 [shape = 'u8[16384]{0}', space=vmem, size = 0x4000, scoped, tag = 'input window, operand 1']
    #allocation6 [shape = 's32[2]{0}', space=sflag, size = 0x8, scoped, tag = 'scoped memory for tpu_custom_call.1']
    #allocation7 [shape = 'u8[8192]{0}', space=vmem, size = 0x2000, scoped, tag = 'output window, operand 0']
    %8 = vsyncpa [#allocation3], 0
    %s9 = scalar_lea.sflag [#allocation3], 1
    %10 = vsyncpa %s9, 0
    %11 = vsyncpa [#allocation6], 0
    %s12 = scalar_lea.sflag [#allocation6], 1
    %13 = vsyncpa %s12, 0
    %14 = vsyncpa [#allocation4], 0
    %s15 = scalar_lea.sflag [#allocation4], 1
    %16 = vsyncpa %s15, 0
    loop: start=0, step=1, limit=6
    $region2: #{tpu_custom_call.1} parent=1 // loop_pre_header
      _
    $region3: #{tpu_custom_call.1} parent=1 // loop_header
      %s18 = sphi 0, %s22
      %p19 = scmp.ge.s32.totalorder %s18, 6
      %s25 = sphi 0, %s44
      %s26 = sphi 0, %s40
      %s27 = sphi 0, %s36
      %s28 = sphi 0, %s25
      %s29 = sphi 0, %s26
      %s30 = sphi 0, %s27
      %s31 = sphi 0, %s28
      %s32 = sphi 0, %s29
      %s33 = sphi 0, %s30
      %s49 = sphi 0, %s51
      %s52 = sphi 0, %s49
      %s53 = sphi 0, %s52
      %s69 = sphi 0, %s53
      %s77 = sphi 0, %s79
      %s80 = sphi 0, %s77
      %s81 = sphi 0, %s80
      %s97 = sphi 0, %s81
      %s105 = sphi 0, %s107
      %s108 = sphi 0, %s105
      %s109 = sphi 0, %s108
      %s125 = sphi 0, %s109
      %s135 = sphi 0, %s137
      %s138 = sphi 0, %s135
      %s139 = sphi 0, %s138
      %s155 = sphi 0, %s139
    $region4: #{tpu_custom_call.1} parent=1 // loop_header_branch
      %21 = sbr.rel (%p19) target = $region8
    $region5: #{tpu_custom_call.1} parent=1 // loop_body
      %s23 = ssub.s32 %s18, 1
      %s24 = ssub.s32 %s18, 2
      %s34 = sadd.s32 1, %s27
      %p35 = scmp.ge.s32.totalorder %s34, 1
      %s36 = scalar_select %p35, 0, %s34
      %s37 = sadd.s32 1, %s26
      %s38 = scalar_select %p35, %s37, %s26
      %p39 = scmp.ge.s32.totalorder %s38, 1
      %s40 = scalar_select %p39, 0, %s38
      %s41 = sadd.s32 1, %s25
      %s42 = scalar_select %p39, %s41, %s25
      %p43 = scmp.ge.s32.totalorder %s42, 4
      %s44 = scalar_select %p43, 0, %s42
      %s45 = ssub.s32 %s25, %s44
      %s46 = ssub.s32 %s26, %s40
      %s47 = sor.u32 %s45, %s46
      %p48 = scmp.eq.s32.totalorder %s47, 0
      %s50 = sadd.s32 %s49, 1
      %s51 = scalar_select %p48, %s49, %s50
      %p54 = pneg %p48
      %p55 = scmp.eq.s32.totalorder %s18, 3
      %p56 = por %p54, %p55
      %p57 = scmp.ne.s32.totalorder %s49, %s52
      %p58 = scmp.eq.s32.totalorder %s18, 0
      %p59 = por %p57, %p58
      %p60 = scmp.ne.s32.totalorder %s49, %s52
      %p61 = scmp.eq.s32.totalorder %s23, 3
      %p62 = por %p60, %p61
      %p63 = scmp.ne.s32.totalorder %s52, %s53
      %p64 = scmp.eq.s32.totalorder %s23, 0
      %p65 = por %p63, %p64
      %p66 = scmp.ne.s32.totalorder %s52, %s53
      %p67 = scmp.eq.s32.totalorder %s24, 3
      %p68 = por %p66, %p67
      %p70 = scmp.ne.s32.totalorder %s53, %s69
      %p71 = scmp.eq.s32.totalorder %s24, 0
      %p72 = por %p70, %p71
      %s73 = ssub.s32 %s25, %s44
      %s74 = ssub.s32 %s27, %s36
      %s75 = sor.u32 %s73, %s74
      %p76 = scmp.eq.s32.totalorder %s75, 0
      %s78 = sadd.s32 %s77, 1
      %s79 = scalar_select %p76, %s77, %s78
      %p82 = pneg %p76
      %p83 = scmp.eq.s32.totalorder %s18, 3
      %p84 = por %p82, %p83
      %p85 = scmp.ne.s32.totalorder %s77, %s80
      %p86 = scmp.eq.s32.totalorder %s18, 0
      %p87 = por %p85, %p86
      %p88 = scmp.ne.s32.totalorder %s77, %s80
      %p89 = scmp.eq.s32.totalorder %s23, 3
      %p90 = por %p88, %p89
      %p91 = scmp.ne.s32.totalorder %s80, %s81
      %p92 = scmp.eq.s32.totalorder %s23, 0
      %p93 = por %p91, %p92
      %p94 = scmp.ne.s32.totalorder %s80, %s81
      %p95 = scmp.eq.s32.totalorder %s24, 3
      %p96 = por %p94, %p95
      %p98 = scmp.ne.s32.totalorder %s81, %s97
      %p99 = scmp.eq.s32.totalorder %s24, 0
      %p100 = por %p98, %p99
      %s101 = ssub.s32 %s25, %s44
      %s102 = ssub.s32 %s27, %s36
      %s103 = sor.u32 %s101, %s102
      %p104 = scmp.eq.s32.totalorder %s103, 0
      %s106 = sadd.s32 %s105, 1
      %s107 = scalar_select %p104, %s105, %s106
      %p110 = pneg %p104
      %p111 = scmp.eq.s32.totalorder %s18, 3
      %p112 = por %p110, %p111
      %p113 = scmp.ne.s32.totalorder %s105, %s108
      %p114 = scmp.eq.s32.totalorder %s18, 0
      %p115 = por %p113, %p114
      %p116 = scmp.ne.s32.totalorder %s105, %s108
      %p117 = scmp.eq.s32.totalorder %s23, 3
      %p118 = por %p116, %p117
      %p119 = scmp.ne.s32.totalorder %s108, %s109
      %p120 = scmp.eq.s32.totalorder %s23, 0
      %p121 = por %p119, %p120
      %p122 = scmp.ne.s32.totalorder %s108, %s109
      %p123 = scmp.eq.s32.totalorder %s24, 3
      %p124 = por %p122, %p123
      %p126 = scmp.ne.s32.totalorder %s109, %s125
      %p127 = scmp.eq.s32.totalorder %s24, 0
      %p128 = por %p126, %p127
      %s129 = ssub.s32 %s25, %s44
      %s130 = ssub.s32 %s26, %s40
      %s131 = sor.u32 %s129, %s130
      %s132 = ssub.s32 %s27, %s36
      %s133 = sor.u32 %s131, %s132
      %p134 = scmp.eq.s32.totalorder %s133, 0
      %s136 = sadd.s32 %s135, 1
      %s137 = scalar_select %p134, %s135, %s136
      %p140 = pneg %p134
      %p141 = scmp.eq.s32.totalorder %s18, 3
      %p142 = por %p140, %p141
      %p143 = scmp.ne.s32.totalorder %s135, %s138
      %p144 = scmp.eq.s32.totalorder %s18, 0
      %p145 = por %p143, %p144
      %p146 = scmp.ne.s32.totalorder %s135, %s138
      %p147 = scmp.eq.s32.totalorder %s23, 3
      %p148 = por %p146, %p147
      %p149 = scmp.ne.s32.totalorder %s138, %s139
      %p150 = scmp.eq.s32.totalorder %s23, 0
      %p151 = por %p149, %p150
      %p152 = scmp.ne.s32.totalorder %s138, %s139
      %p153 = scmp.eq.s32.totalorder %s24, 3
      %p154 = por %p152, %p153
      %p156 = scmp.ne.s32.totalorder %s139, %s155
      %p157 = scmp.eq.s32.totalorder %s24, 0
      %p158 = por %p156, %p157
      %p159 = scmp.le.s32.totalorder 1, %s18
      %p160 = scmp.lt.s32.totalorder %s18, 5
      %p161 = pnand %p159, %p160
      %p162 = pneg %p161
      // Predicated region
      $region9: #{tpu_custom_call.1} parent=5 // pred_check
        _
      $region10: #{tpu_custom_call.1} parent=5 // pred_check_branch
        %164 = sbr.rel (%p161) target = $region12
      $region11: #{tpu_custom_call.1} parent=5 // pred_region
        %s165 = ssub.s32 %s18, 1
      $region12: #{tpu_custom_call.1} parent=5 // pred_fallthru
        _
      %p166 = scmp.lt.s32.totalorder %s18, 4
      // Predicated region
      $region13: #{tpu_custom_call.1} parent=5 // pred_check
        %p167 = pneg %p166
      $region14: #{tpu_custom_call.1} parent=5 // pred_check_branch
        %169 = sbr.rel (%p167) target = $region16
      $region15: #{tpu_custom_call.1} parent=5 // pred_region
        // Predicated region
        $region17: #{tpu_custom_call.1} parent=15 // pred_check
          %p170 = pneg %p59
        $region18: #{tpu_custom_call.1} parent=15 // pred_check_branch
          %172 = sbr.rel (%p170) target = $region20
        $region19: #{tpu_custom_call.1} parent=15 // pred_region
          %s173 = sand.u32 %s49, 1
          %s174 = scalar_lea.sflag [#allocation3], %s173
          %s175 = sand.u32 %s49, 1
          %s176 = smul.addr %s175, 8
          %s177 = scalar_lea.vmem [#allocation2], %s176
          %s179 = ssub.s32 128, 128
          %180 = vsyncadd %s174, %s179
          %s181 = sadd.s32 %s26, %s25
          %s182 = smul.addr %s181, 128
          %s183 = scalar_lea.hbm %s0, %s182
          %s185 = sshll.u32 %s177, 4
          %s186 = int_to_ptr.vmem [resolvable:$true] %s185
          %188 = dma.hbm_to_vmem [thread:$0]  %s183, 128, %s186, %s174
        $region20: #{tpu_custom_call.1} parent=15 // pred_fallthru
          _
        // Predicated region
        $region21: #{tpu_custom_call.1} parent=15 // pred_check
          %p189 = pneg %p87
        $region22: #{tpu_custom_call.1} parent=15 // pred_check_branch
          %191 = sbr.rel (%p189) target = $region24
        $region23: #{tpu_custom_call.1} parent=15 // pred_region
          %s192 = sand.u32 %s77, 1
          %s193 = scalar_lea.sflag [#allocation6], %s192
          %s194 = sand.u32 %s77, 1
          %s195 = smul.addr %s194, 16
          %s196 = scalar_lea.vmem [#allocation5], %s195
          %s198 = ssub.s32 256, 256
          %199 = vsyncadd %s193, %s198
          %s200 = smul.addr %s25, 2
          %s201 = sadd.s32 %s27, %s200
          %s202 = smul.addr %s201, 128
          %s203 = scalar_lea.hbm %s1, %s202
          %s204 = sshll.u32 %s196, 4
          %s205 = int_to_ptr.vmem [resolvable:$true] %s204
          %210 = dma.hbm_to_vmem [thread:$0]  %s203, 256, %s205, %s193, 128, 128, 8
        $region24: #{tpu_custom_call.1} parent=15 // pred_fallthru
          _
        // Predicated region
        $region25: #{tpu_custom_call.1} parent=15 // pred_check
          %p211 = pneg %p115
        $region26: #{tpu_custom_call.1} parent=15 // pred_check_branch
          %213 = sbr.rel (%p211) target = $region28
        $region27: #{tpu_custom_call.1} parent=15 // pred_region
          %p214 = scmp.lt.s32.totalorder %s25, 3
          %s215 = scalar_select %p214, %s25, 3
          %p216 = scmp.lt.s32.totalorder %s27, 0
          %s217 = scalar_select %p216, %s27, 0
          %s218 = sadd.s32 %s217, %s215
          %s219 = scalar_lea.vmem %s2, %s218
        $region28: #{tpu_custom_call.1} parent=15 // pred_fallthru
          _
      $region16: #{tpu_custom_call.1} parent=5 // pred_fallthru
        _
      %p220 = scmp.le.s32.totalorder 1, %s18
      %p221 = scmp.lt.s32.totalorder %s18, 5
      %p222 = pnand %p220, %p221
      %p223 = pneg %p222
      // Predicated region
      $region29: #{tpu_custom_call.1} parent=5 // pred_check
        _
      $region30: #{tpu_custom_call.1} parent=5 // pred_check_branch
        %225 = sbr.rel (%p222) target = $region32
      $region31: #{tpu_custom_call.1} parent=5 // pred_region
        %s226 = ssub.s32 %s18, 1
        %s227 = sand.u32 %s52, 1
        %s228 = scalar_lea.sflag [#allocation3], %s227
        %s229 = sand.u32 %s52, 1
        %s230 = smul.addr %s229, 8
        %s231 = scalar_lea.vmem [#allocation2], %s230
        // Predicated region
        $region33: #{tpu_custom_call.1} parent=31 // pred_check
          %p232 = pneg %p65
        $region34: #{tpu_custom_call.1} parent=31 // pred_check_branch
          %234 = sbr.rel (%p232) target = $region36
        $region35: #{tpu_custom_call.1} parent=31 // pred_region
          %235 = dma.done %s228, 128
        $region36: #{tpu_custom_call.1} parent=31 // pred_fallthru
          _
        %s236 = sand.u32 %s80, 1
        %s237 = scalar_lea.sflag [#allocation6], %s236
        %s238 = sand.u32 %s80, 1
        %s239 = smul.addr %s238, 16
        %s240 = scalar_lea.vmem [#allocation5], %s239
        // Predicated region
        $region37: #{tpu_custom_call.1} parent=31 // pred_check
          %p241 = pneg %p93
        $region38: #{tpu_custom_call.1} parent=31 // pred_check_branch
          %243 = sbr.rel (%p241) target = $region40
        $region39: #{tpu_custom_call.1} parent=31 // pred_region
          %244 = dma.done %s237, 256
        $region40: #{tpu_custom_call.1} parent=31 // pred_fallthru
          _
        %s245 = sand.u32 %s52, 1
        %s246 = scalar_lea.sflag [#allocation3], %s245
        %s247 = sand.u32 %s52, 1
        %s248 = smul.addr %s247, 8
        %s249 = scalar_lea.vmem [#allocation2], %s248
        %p250 = pneg %p65
        %p251 = pneg %p62
        %s252 = sand.u32 %s80, 1
        %s253 = scalar_lea.sflag [#allocation6], %s252
        %s254 = sand.u32 %s80, 1
        %s255 = smul.addr %s254, 16
        %s256 = scalar_lea.vmem [#allocation5], %s255
        %p257 = pneg %p93
        %p258 = pneg %p90
        %p259 = scmp.lt.s32.totalorder %s28, 3
        %s260 = scalar_select %p259, %s28, 3
        %p261 = scmp.lt.s32.totalorder %s30, 0
        %s262 = scalar_select %p261, %s30, 0
        %s263 = sadd.s32 %s262, %s260
        %s264 = scalar_lea.vmem %s2, %s263
        %p265 = pneg %p121
        %p266 = pneg %p118
        %p267 = pneg %p151
        %p268 = pneg %p148
        %s269 = sand.u32 %s138, 1
        %s270 = scalar_lea.sflag [#allocation4], %s269
        %s271 = sand.u32 %s138, 1
        %s272 = smul.addr %s271, 8
        %s273 = scalar_lea.vmem [#allocation7], %s272
        %p274 = scmp.lt.s32.totalorder %s28, 3
        %s275 = scalar_select %p274, %s28, 3
        %p276 = scmp.lt.s32.totalorder %s30, 0
        %s277 = scalar_select %p276, %s30, 0
        %s278 = sadd.s32 %s277, %s275
        %s279 = scalar_lea.vmem %s2, %s278
        %v280 = vld [vmem:[%s231] sm:$0xff]
        %v281 = vld [vmem:[%s240] sm:$0xff]
        %v282 = vld [vmem:[%s240 + $0x8] sm:$0xff]
        %v283 = vld [vmem:[%s279] sm:$0x1]
        %v285 = vlaneseq
        %v286 = vshrl.u32 %v285, 7
        %v287 = vsub.s32 0, %v286
        %v288 = vrot.slane %v283, %v287
        %vm290 = vcmask 130048
        %v292 = vsel %vm290, %v280, 0
        %294 = vmatprep.subr.mxu0 0.0
        %295 = vmatpush1.msra.mxu0 %v281
        %296 = vmatprep.subr.mxu0 0.0
        %297 = vmatpush1.msra.mxu0 %v282
        %298 = vmatprep.subr.mxu0 0.0
        %299 = vmatpush1.msra.mxu0 0.0
        %300 = vmatprep.subr.mxu0 0.0
        %301 = vmatpush1.msra.mxu0 0.0
        %302 = vmatprep.subr.mxu0 0.0
        %303 = vmatpush1.msra.mxu0 0.0
        %304 = vmatprep.subr.mxu0 0.0
        %305 = vmatpush1.msra.mxu0 0.0
        %306 = vmatprep.subr.mxu0 0.0
        %307 = vmatpush1.msra.mxu0 0.0
        %308 = vmatprep.subr.mxu0 0.0
        %309 = vmatpush1.msra.mxu0 0.0
        %310 = vmatprep.subr.mxu0 0.0
        %311 = vmatpush1.msra.mxu0 0.0
        %312 = vmatprep.subr.mxu0 0.0
        %313 = vmatpush1.msra.mxu0 0.0
        %314 = vmatprep.subr.mxu0 0.0
        %315 = vmatpush1.msra.mxu0 0.0
        %316 = vmatprep.subr.mxu0 0.0
        %317 = vmatpush1.msra.mxu0 0.0
        %318 = vmatprep.subr.mxu0 0.0
        %319 = vmatpush1.msra.mxu0 0.0
        %320 = vmatprep.subr.mxu0 0.0
        %321 = vmatpush1.msra.mxu0 0.0
        %322 = vmatprep.subr.mxu0 0.0
        %323 = vmatpush1.msra.mxu0 0.0
        %324 = vmatprep.subr.mxu0 0.0
        %325 = vmatpush1.msra.mxu0 0.0
        %326 = vmatprep.subr.mxu0 0.0
        %327 = vmatpush1.msra.mxu0 0.0
        %328 = vmatprep.subr.mxu0 0.0
        %329 = vmatpush1.msra.mxu0 0.0
        %330 = vmatprep.subr.mxu0 0.0
        %331 = vmatpush1.msra.mxu0 0.0
        %332 = vmatprep.subr.mxu0 0.0
        %333 = vmatpush1.msra.mxu0 0.0
        %334 = vmatprep.subr.mxu0 0.0
        %335 = vmatpush1.msra.mxu0 0.0
        %336 = vmatprep.subr.mxu0 0.0
        %337 = vmatpush1.msra.mxu0 0.0
        %338 = vmatprep.subr.mxu0 0.0
        %339 = vmatpush1.msra.mxu0 0.0
        %340 = vmatprep.subr.mxu0 0.0
        %341 = vmatpush1.msra.mxu0 0.0
        %342 = vmatprep.subr.mxu0 0.0
        %343 = vmatpush1.msra.mxu0 0.0
        %344 = vmatprep.subr.mxu0 0.0
        %345 = vmatpush1.msra.mxu0 0.0
        %346 = vmatprep.subr.mxu0 0.0
        %347 = vmatpush1.msra.mxu0 0.0
        %348 = vmatprep.subr.mxu0 0.0
        %349 = vmatpush1.msra.mxu0 0.0
        %350 = vmatprep.subr.mxu0 0.0
        %351 = vmatpush1.msra.mxu0 0.0
        %352 = vmatprep.subr.mxu0 0.0
        %353 = vmatpush1.msra.mxu0 0.0
        %354 = vmatprep.subr.mxu0 0.0
        %355 = vmatpush1.msra.mxu0 0.0
        %356 = vmatprep.subr.mxu0 0.0
        %357 = vmatpush1.msra.mxu0 0.0
        %358 = vmatprep.mubr.f32.mxu0 0.0
        %359 = vmatmul.mubr.f32.gmra.mrb[0].mxu0 %v292
        %v360 = vpop.f32.mrb[0].mxu0
        %v361 = vadd.f32 %v288, %v360
        %v362 = vpop.f32.mrb[0].mxu0
        %363 = vdwg.mxu0
        %364 = vst [vmem:[%s273] sm:$0xff] %v361
        %s365 = sand.u32 %s138, 1
        %s366 = scalar_lea.sflag [#allocation4], %s365
        %s367 = sand.u32 %s138, 1
        %s368 = smul.addr %s367, 8
        %s369 = scalar_lea.vmem [#allocation7], %s368
        // Predicated region
        $region41: #{tpu_custom_call.1} parent=31 // pred_check
          %p370 = pneg %p148
        $region42: #{tpu_custom_call.1} parent=31 // pred_check_branch
          %372 = sbr.rel (%p370) target = $region44
        $region43: #{tpu_custom_call.1} parent=31 // pred_region
          %s374 = ssub.s32 128, 128
          %375 = vsyncadd %s366, %s374
          %s376 = sadd.s32 %s30, %s29
          %s377 = sadd.s32 %s376, %s28
          %s378 = smul.addr %s377, 128
          %s379 = scalar_lea.hbm %s3, %s378
          %s381 = sshll.u32 %s369, 4
          %s382 = int_to_ptr.vmem [resolvable:$true] %s381
          %384 = dma.vmem_to_hbm [thread:$0]  %s382, 128, %s379, %s366
        $region44: #{tpu_custom_call.1} parent=31 // pred_fallthru
          _
      $region32: #{tpu_custom_call.1} parent=5 // pred_fallthru
        _
      %p385 = scmp.le.s32.totalorder 2, %s18
      // Predicated region
      $region45: #{tpu_custom_call.1} parent=5 // pred_check
        %p386 = pneg %p385
      $region46: #{tpu_custom_call.1} parent=5 // pred_check_branch
        %388 = sbr.rel (%p386) target = $region48
      $region47: #{tpu_custom_call.1} parent=5 // pred_region
        %s389 = ssub.s32 %s18, 2
        // Predicated region
        $region49: #{tpu_custom_call.1} parent=47 // pred_check
          %p390 = pneg %p154
        $region50: #{tpu_custom_call.1} parent=47 // pred_check_branch
          %392 = sbr.rel (%p390) target = $region52
        $region51: #{tpu_custom_call.1} parent=47 // pred_region
          %s393 = sand.u32 %s139, 1
          %s394 = scalar_lea.sflag [#allocation4], %s393
          %s395 = sand.u32 %s139, 1
          %s396 = smul.addr %s395, 8
          %s397 = scalar_lea.vmem [#allocation7], %s396
          %398 = dma.done %s394, 128
        $region52: #{tpu_custom_call.1} parent=47 // pred_fallthru
          _
      $region48: #{tpu_custom_call.1} parent=5 // pred_fallthru
        _
    $region6: #{tpu_custom_call.1} parent=1 // loop_footer
      %s22 = sadd.s32 1, %s18
    $region7: #{tpu_custom_call.1} parent=1 // loop_footer_branch
      %17 = sbr.rel target = $region3
    $region8: #{tpu_custom_call.1} parent=1 // loop_exit
      _
    %399 = vsyncpa [#allocation3], 1
    %s400 = scalar_lea.sflag [#allocation3], 1
    %401 = vsyncpa %s400, 1
    %402 = vsyncpa [#allocation6], 1
    %s403 = scalar_lea.sflag [#allocation6], 1
    %404 = vsyncpa %s403, 1
    %405 = vsyncpa [#allocation4], 1
    %s406 = scalar_lea.sflag [#allocation4], 1
    %407 = vsyncpa %s406, 1

</llo_original>
